<compile_context>
chip_gen: v5e
topology: v5e:2x2
jax: 0.10.0
libtpu: 0.0.40
codegen_flags: <defaults>
</compile_context>

<pallas_src>
import jax
import jax.numpy as jnp
from jax import lax
from jax.experimental import pallas as pl
from jax.experimental.pallas import tpu as pltpu

LANES = 128
TARGET_BLOCK_ROWS = 2048  # 2048 * 128 * 4B = 1 MiB per f32 input tile


def _make_kernel(rows, block_rows, inner_steps):
    def kernel(y_ref, yh_ref, out_ref, inter_acc, diff_acc):
        split = pl.program_id(0)
        inner = pl.program_id(1)

        @pl.when(inner == 0)
        def _():
            inter_acc[...] = jnp.zeros_like(inter_acc)
            diff_acc[...] = jnp.zeros_like(diff_acc)

        # Unclamped global row-block index -> mask out ragged / out-of-range rows.
        rb = split * inner_steps + inner
        row_start = rb * block_rows
        row_ids = (
            lax.broadcasted_iota(jnp.int32, (block_rows, LANES), 0) + row_start
        )
        mask = row_ids < rows

        # Cast per-tile in VMEM (inputs stay in their native dtype in HBM).
        y = y_ref[...].astype(jnp.float32)
        yh = yh_ref[...].astype(jnp.float32)
        d = y - yh
        inter_acc[...] += jnp.where(mask, y * yh, 0.0)
        diff_acc[...] += jnp.where(mask, d * d, 0.0)

        @pl.when(inner == pl.num_programs(1) - 1)
        def _():
            # Single epilogue reduction per split; partial sums go to SMEM.
            out_ref[0, 0] = jnp.sum(inter_acc[...])
            out_ref[0, 1] = jnp.sum(diff_acc[...])

    return kernel


@jax.jit
def jaccard_loss(y, y_hat):
    assert y.shape == y_hat.shape, "y and y_hat must have the same shape"

    yf = jnp.ravel(y)          # keep native dtype; cast happens in-kernel
    yhf = jnp.ravel(y_hat)
    n = yf.shape[0]

    # Only pad to a multiple of 128 lanes (<= 127 elems); ragged row-blocks are
    # handled by the in-kernel mask, so no full tile-sized pad is needed.
    pad = (-n) % LANES
    if pad:
        yf = jnp.pad(yf, (0, pad))
        yhf = jnp.pad(yhf, (0, pad))
    rows = (n + pad) // LANES
    y2d = yf.reshape(rows, LANES)
    yh2d = yhf.reshape(rows, LANES)

    # Block size: as large as the data allows, capped at 1 MiB f32 per tile.
    block_rows = min(TARGET_BLOCK_ROWS, ((rows + 7) // 8) * 8)
    num_row_blocks = (rows + block_rows - 1) // block_rows
    num_splits = 2 if num_row_blocks >= 2 else 1   # megacore split on v7x
    inner_steps = (num_row_blocks + num_splits - 1) // num_splits

    def in_index_map(s, i):
        rb = s * inner_steps + i
        # Clamp fully out-of-range blocks (their contribution is masked to 0).
        return (jnp.minimum(rb, num_row_blocks - 1), 0)

    kernel = _make_kernel(rows, block_rows, inner_steps)
    itemsize = jnp.dtype(y.dtype).itemsize

    partials = pl.pallas_call(
        kernel,
        out_shape=jax.ShapeDtypeStruct((num_splits, 2), jnp.float32),
        grid_spec=pltpu.PrefetchScalarGridSpec(
            num_scalar_prefetch=0,
            grid=(num_splits, inner_steps),
            in_specs=[
                pl.BlockSpec((block_rows, LANES), in_index_map),
                pl.BlockSpec((block_rows, LANES), in_index_map),
            ],
            out_specs=pl.BlockSpec(
                (1, 2), lambda s, i: (s, 0), memory_space=pltpu.SMEM
            ),
            scratch_shapes=[
                pltpu.VMEM((block_rows, LANES), jnp.float32),  # sum(y*yh)
                pltpu.VMEM((block_rows, LANES), jnp.float32),  # sum((y-yh)^2)
            ],
        ),
        compiler_params=pltpu.CompilerParams(
            dimension_semantics=("parallel", "arbitrary"),
        ),
        cost_estimate=pl.CostEstimate(
            flops=5 * n, transcendentals=0, bytes_accessed=2 * n * itemsize
        ),
    )(y2d, yh2d)

    inter = jnp.sum(partials[:, 0])
    sq_diff = jnp.sum(partials[:, 1])
    union = sq_diff + inter            # == sum(y^2) + sum(yh^2) - inter
    # NOTE: union == 0 (all-zero inputs) yields NaN, matching the PyTorch ref.
    return jnp.float32(1.0) - inter / union


def jaccard_loss_ref(y, y_hat):
    y = y.astype(jnp.float32)
    y_hat = y_hat.astype(jnp.float32)
    inter = jnp.sum(y * y_hat)
    union = jnp.sum(y * y) + jnp.sum(y_hat * y_hat) - inter
    return 1.0 - inter / union


if __name__ == "__main__":
    key = jax.random.PRNGKey(0)
    k1, k2 = jax.random.split(key)

    # Main small case consistent with a segmentation use-case (NCHW).
    y = jax.random.uniform(k1, (2, 4, 16, 16), dtype=jnp.float32)
    y_hat = jax.random.uniform(k2, (2, 4, 16, 16), dtype=jnp.float32)
    loss = jaccard_loss(y, y_hat)
    jax.block_until_ready(loss)
    ref = jaccard_loss_ref(y, y_hat)
    assert jnp.allclose(loss, ref, atol=1e-5, rtol=1e-5), (loss, ref)

    # Ragged case: numel not a multiple of 128 (exercises pad + row mask).
    k3, k4 = jax.random.split(k2)
    ya = jax.random.uniform(k3, (3, 5, 33, 17), dtype=jnp.float32)
    yb = jax.random.uniform(k4, (3, 5, 33, 17), dtype=jnp.float32)
    loss2 = jaccard_loss(ya, yb)
    jax.block_until_ready(loss2)
    ref2 = jaccard_loss_ref(ya, yb)
    assert jnp.allclose(loss2, ref2, atol=1e-5, rtol=1e-5), (loss2, ref2)

    # Larger case: exercises the 2-way parallel split path (2 row blocks).
    k5, k6 = jax.random.split(k4)
    yc = jax.random.uniform(k5, (8, 8, 64, 128), dtype=jnp.float32)
    yd = jax.random.uniform(k6, (8, 8, 64, 128), dtype=jnp.float32)
    loss3 = jaccard_loss(yc, yd)
    jax.block_until_ready(loss3)
    ref3 = jaccard_loss_ref(yc, yd)
    assert jnp.allclose(loss3, ref3, atol=1e-5, rtol=1e-5), (loss3, ref3)

    print("KERNEL_OK")
</pallas_src>

<mosaic_0001>
module attributes {stable_mosaic.version = 11 : i64} {
  func.func @kernel(%arg0: i32, %arg1: i32, %arg2: memref<16x128xf32, #tpu.memory_space<vmem>>, %arg3: memref<16x128xf32, #tpu.memory_space<vmem>>, %arg4: memref<1x2xf32, #tpu.memory_space<smem>>, %arg5: memref<16x128xf32, #tpu.memory_space<vmem>>, %arg6: memref<16x128xf32, #tpu.memory_space<vmem>>) attributes {dimension_semantics = [#tpu.dimension_semantics<parallel>, #tpu.dimension_semantics<arbitrary>], iteration_bounds = array<i64: 1, 1>, scalar_prefetch = 0 : i64, scratch_operands = 2 : i64, tpu.core_type = #tpu.core_type<tc>, window_params = [{transform_indices = @transform_0, window_bounds = array<i64: 16, 128>}, {transform_indices = @transform_1, window_bounds = array<i64: 16, 128>}, {transform_indices = @transform_2, window_bounds = array<i64: 1, 2>}]} {
    %c0_i32 = arith.constant 0 : i32
    %0 = arith.cmpi eq, %arg1, %c0_i32 : i32
    %1 = arith.extui %0 : i1 to i32
    %c0_i32_0 = arith.constant 0 : i32
    %2 = arith.cmpi ne, %1, %c0_i32_0 : i32
    scf.if %2 {
      %cst_16 = arith.constant 0.000000e+00 : f32
      %29 = vector.broadcast %cst_16 : f32 to vector<16x128xf32>
      %c0_17 = arith.constant 0 : index
      %c0_18 = arith.constant 0 : index
      %30 = vector.load %arg5[%c0_17, %c0_18] : memref<16x128xf32, #tpu.memory_space<vmem>>, vector<16x128xf32>
      tpu.vector_store %arg5[%c0_17, %c0_18], %29 {strides = array<i32>} : memref<16x128xf32, #tpu.memory_space<vmem>>, vector<16x128xf32>,
      %cst_19 = arith.constant 0.000000e+00 : f32
      %31 = vector.broadcast %cst_19 : f32 to vector<16x128xf32>
      %c0_20 = arith.constant 0 : index
      %c0_21 = arith.constant 0 : index
      %32 = vector.load %arg6[%c0_20, %c0_21] : memref<16x128xf32, #tpu.memory_space<vmem>>, vector<16x128xf32>
      tpu.vector_store %arg6[%c0_20, %c0_21], %31 {strides = array<i32>} : memref<16x128xf32, #tpu.memory_space<vmem>>, vector<16x128xf32>,
    } else {
    }
    %c1_i32 = arith.constant 1 : i32
    %3 = arith.muli %arg0, %c1_i32 : i32
    %4 = arith.addi %3, %arg1 : i32
    %c16_i32 = arith.constant 16 : i32
    %5 = arith.muli %4, %c16_i32 : i32
    %6 = tpu.iota {dimensions = array<i32: 0>} : vector<16x128xi32>
    %7 = vector.broadcast %5 : i32 to vector<16x128xi32>
    %8 = arith.addi %6, %7 : vector<16x128xi32>
    %c16_i32_1 = arith.constant 16 : i32
    %9 = vector.broadcast %c16_i32_1 : i32 to vector<16x128xi32>
    %10 = arith.cmpi slt, %8, %9 : vector<16x128xi32>
    %c0 = arith.constant 0 : index
    %c0_2 = arith.constant 0 : index
    %11 = vector.load %arg2[%c0, %c0_2] : memref<16x128xf32, #tpu.memory_space<vmem>>, vector<16x128xf32>
    %c0_3 = arith.constant 0 : index
    %c0_4 = arith.constant 0 : index
    %12 = vector.load %arg3[%c0_3, %c0_4] : memref<16x128xf32, #tpu.memory_space<vmem>>, vector<16x128xf32>
    %13 = arith.subf %11, %12 : vector<16x128xf32>
    %c0_5 = arith.constant 0 : index
    %c0_6 = arith.constant 0 : index
    %14 = vector.load %arg5[%c0_5, %c0_6] : memref<16x128xf32, #tpu.memory_space<vmem>>, vector<16x128xf32>
    %15 = arith.mulf %11, %12 : vector<16x128xf32>
    %cst = arith.constant 0.000000e+00 : f32
    %16 = vector.broadcast %cst : f32 to vector<16x128xf32>
    %17 = arith.select %10, %15, %16 : vector<16x128xi1>, vector<16x128xf32>
    %18 = arith.addf %14, %17 : vector<16x128xf32>
    %c0_7 = arith.constant 0 : index
    %c0_8 = arith.constant 0 : index
    %19 = vector.load %arg5[%c0_7, %c0_8] : memref<16x128xf32, #tpu.memory_space<vmem>>, vector<16x128xf32>
    tpu.vector_store %arg5[%c0_7, %c0_8], %18 {strides = array<i32>} : memref<16x128xf32, #tpu.memory_space<vmem>>, vector<16x128xf32>,
    %c0_9 = arith.constant 0 : index
    %c0_10 = arith.constant 0 : index
    %20 = vector.load %arg6[%c0_9, %c0_10] : memref<16x128xf32, #tpu.memory_space<vmem>>, vector<16x128xf32>
    %21 = arith.mulf %13, %13 : vector<16x128xf32>
    %cst_11 = arith.constant 0.000000e+00 : f32
    %22 = vector.broadcast %cst_11 : f32 to vector<16x128xf32>
    %23 = arith.select %10, %21, %22 : vector<16x128xi1>, vector<16x128xf32>
    %24 = arith.addf %20, %23 : vector<16x128xf32>
    %c0_12 = arith.constant 0 : index
    %c0_13 = arith.constant 0 : index
    %25 = vector.load %arg6[%c0_12, %c0_13] : memref<16x128xf32, #tpu.memory_space<vmem>>, vector<16x128xf32>
    tpu.vector_store %arg6[%c0_12, %c0_13], %24 {strides = array<i32>} : memref<16x128xf32, #tpu.memory_space<vmem>>, vector<16x128xf32>,
    %c0_i32_14 = arith.constant 0 : i32
    %26 = arith.cmpi eq, %arg1, %c0_i32_14 : i32
    %27 = arith.extui %26 : i1 to i32
    %c0_i32_15 = arith.constant 0 : i32
    %28 = arith.cmpi ne, %27, %c0_i32_15 : i32
    scf.if %28 {
      %c0_16 = arith.constant 0 : index
      %c0_17 = arith.constant 0 : index
      %29 = vector.load %arg5[%c0_16, %c0_17] : memref<16x128xf32, #tpu.memory_space<vmem>>, vector<16x128xf32>
      %30 = vector.shape_cast %29 : vector<16x128xf32> to vector<1x16x128xf32>
      %cst_18 = arith.constant dense<0.000000e+00> : vector<1xf32>
      %31 = vector.multi_reduction <add>, %30, %cst_18 [1, 2] : vector<1x16x128xf32> to vector<1xf32>
      %32 = vector.shape_cast %31 : vector<1xf32> to vector<1x1x1xf32>
      %33 = vector.extract %32[0, 0, 0] : f32 from vector<1x1x1xf32>
      %c0_19 = arith.constant 0 : index
      %c0_20 = arith.constant 0 : index
      %34 = memref.load %arg4[%c0_19, %c0_20] : memref<1x2xf32, #tpu.memory_space<smem>>
      memref.store %33, %arg4[%c0_19, %c0_20] : memref<1x2xf32, #tpu.memory_space<smem>>
      %c0_21 = arith.constant 0 : index
      %c0_22 = arith.constant 0 : index
      %35 = vector.load %arg6[%c0_21, %c0_22] : memref<16x128xf32, #tpu.memory_space<vmem>>, vector<16x128xf32>
      %36 = vector.shape_cast %35 : vector<16x128xf32> to vector<1x16x128xf32>
      %cst_23 = arith.constant dense<0.000000e+00> : vector<1xf32>
      %37 = vector.multi_reduction <add>, %36, %cst_23 [1, 2] : vector<1x16x128xf32> to vector<1xf32>
      %38 = vector.shape_cast %37 : vector<1xf32> to vector<1x1x1xf32>
      %39 = vector.extract %38[0, 0, 0] : f32 from vector<1x1x1xf32>
      %c0_24 = arith.constant 0 : index
      %c1 = arith.constant 1 : index
      %40 = memref.load %arg4[%c0_24, %c1] : memref<1x2xf32, #tpu.memory_space<smem>>
      memref.store %39, %arg4[%c0_24, %c1] : memref<1x2xf32, #tpu.memory_space<smem>>
    } else {
    }
    return
  }
  func.func @transform_0(%arg0: i32, %arg1: i32) -> (i32, i32) {
    %c1_i32 = arith.constant 1 : i32
    %0 = arith.muli %arg0, %c1_i32 : i32
    %1 = arith.addi %0, %arg1 : i32
    %c0_i32 = arith.constant 0 : i32
    %2 = arith.minsi %1, %c0_i32 : i32
    %c0_i32_0 = arith.constant 0 : i32
    %c0_i32_1 = arith.constant 0 : i32
    return %2, %c0_i32_0 : i32, i32
  }
  func.func @transform_1(%arg0: i32, %arg1: i32) -> (i32, i32) {
    %c1_i32 = arith.constant 1 : i32
    %0 = arith.muli %arg0, %c1_i32 : i32
    %1 = arith.addi %0, %arg1 : i32
    %c0_i32 = arith.constant 0 : i32
    %2 = arith.minsi %1, %c0_i32 : i32
    %c0_i32_0 = arith.constant 0 : i32
    %c0_i32_1 = arith.constant 0 : i32
    return %2, %c0_i32_0 : i32, i32
  }
  func.func @transform_2(%arg0: i32, %arg1: i32) -> (i32, i32) {
    %c0_i32 = arith.constant 0 : i32
    %c0_i32_0 = arith.constant 0 : i32
    return %arg0, %c0_i32 : i32, i32
  }
}

</mosaic_0001>

<llo_original>
// kernel: jaccard_loss.1
$region0: #{jaccard_loss.1}
  #allocation0 [shape = 'u32[]', space=smem, size = 0x4, offset = 0x4, fixed_abs, tag = 'smem constant byte address 0x4 - core index']
  #allocation1 [shape = 'u32[72,128]{1,0:T(1,128)}', space=vmem, size = 0x9000, scoped, tag = 'internal scratch']
  #allocation2 [shape = 'f32[16,128]{1,0:T(8,128)}', space=vmem, size = 0x2000, scoped, tag = 'scratch operand']
  #allocation3 [shape = 'f32[16,128]{1,0:T(8,128)}', space=vmem, size = 0x2000, scoped, tag = 'scratch operand']
  %s0 = inlined_call_operand.vmem [shape: f32[16,128], index: 0, kind: input, shape index: {}]
  %s1 = inlined_call_operand.vmem [shape: f32[16,128], index: 1, kind: input, shape index: {}]
  %s2 = inlined_call_operand.vmem [shape: f32[1,2], index: 2, kind: output, shape index: {}]
  %s3 = sld [smem:[#allocation0]]
  $region26: #{jaccard_loss.1} parent=0
    _
  %s5 = ssub.s32 1, %s3
  %s6 = scalar_select 0, %s5, %s3
  $region1: #{jaccard_loss.1} parent=0
    #allocation4 [shape = 'u8[512]{0}', space=smem, size = 0x200, scoped, tag = 'output window, operand 0, single buffered']
    #allocation5 [shape = 's32[1]{0}', space=sflag, size = 0x4, scoped, tag = 'scoped memory for jaccard_loss.1']
    %7 = vsyncpa [#allocation5], 0
    // Predicated region
    $region2: #{jaccard_loss.1} parent=1 // pred_check
      _
    $region3: #{jaccard_loss.1} parent=1 // pred_check_branch
      %9 = sbr.rel (0) target = $region5
    $region4: #{jaccard_loss.1} parent=1 // pred_region
      %s10 = sadd.s32 0, 0
      %p11 = scmp.lt.s32.totalorder %s10, 0
      %s12 = scalar_select %p11, %s10, 0
      %s13 = smul.u32 2, %s12
      %p14 = scmp.lt.s32.totalorder %s13, 1
      %s15 = scalar_select %p14, %s13, 1
      %s16 = smul.addr %s15, 8
      %s17 = scalar_lea.vmem %s0, %s16
      %s18 = sadd.s32 0, 0
      %p19 = scmp.lt.s32.totalorder %s18, 0
      %s20 = scalar_select %p19, %s18, 0
      %s21 = smul.u32 2, %s20
    $region5: #{jaccard_loss.1} parent=1 // pred_fallthru
      _
    // Predicated region
    $region6: #{jaccard_loss.1} parent=1 // pred_check
      _
    $region7: #{jaccard_loss.1} parent=1 // pred_check_branch
      %23 = sbr.rel (0) target = $region9
    $region8: #{jaccard_loss.1} parent=1 // pred_region
      %s24 = sadd.s32 0, 0
      %p25 = scmp.lt.s32.totalorder %s24, 0
      %s26 = scalar_select %p25, %s24, 0
      %s27 = smul.u32 2, %s26
      %p28 = scmp.lt.s32.totalorder %s27, 1
      %s29 = scalar_select %p28, %s27, 1
      %s30 = smul.addr %s29, 8
      %s31 = scalar_lea.vmem %s1, %s30
      %s32 = sadd.s32 0, 0
      %p33 = scmp.lt.s32.totalorder %s32, 0
      %s34 = scalar_select %p33, %s32, 0
      %s35 = smul.u32 2, %s34
    $region9: #{jaccard_loss.1} parent=1 // pred_fallthru
      _
    %s36 = sadd.s32 0, 0
    %p37 = scmp.lt.s32.totalorder %s36, 0
    %s38 = scalar_select %p37, %s36, 0
    %s39 = smul.u32 2, %s38
    %p40 = scmp.lt.s32.totalorder %s39, 1
    %s41 = scalar_select %p40, %s39, 1
    %s42 = smul.addr %s41, 8
    %s43 = scalar_lea.vmem %s0, %s42
    %s44 = sadd.s32 0, 0
    %p45 = scmp.lt.s32.totalorder %s44, 0
    %s46 = scalar_select %p45, %s44, 0
    %s47 = smul.u32 2, %s46
    %p48 = scmp.lt.s32.totalorder %s47, 1
    %s49 = scalar_select %p48, %s47, 1
    %s50 = smul.addr %s49, 8
    %s51 = scalar_lea.vmem %s1, %s50
    %s52 = sadd.s32 0, 0
    %p53 = scmp.lt.s32.totalorder %s52, 0
    %s54 = scalar_select %p53, %s52, 0
    %s55 = smul.u32 2, %s54
    %p56 = scmp.lt.s32.totalorder %s55, 1
    %s57 = scalar_select %p56, %s55, 1
    %s58 = smul.addr %s57, 8
    %s59 = scalar_lea.vmem %s0, %s58
    %s60 = sadd.s32 0, 0
    %p61 = scmp.lt.s32.totalorder %s60, 0
    %s62 = scalar_select %p61, %s60, 0
    %s63 = smul.u32 2, %s62
    %s64 = sadd.s32 0, 0
    %p65 = scmp.lt.s32.totalorder %s64, 0
    %s66 = scalar_select %p65, %s64, 0
    %s67 = smul.u32 2, %s66
    %p68 = scmp.lt.s32.totalorder %s67, 1
    %s69 = scalar_select %p68, %s67, 1
    %s70 = smul.addr %s69, 8
    %s71 = scalar_lea.vmem %s1, %s70
    %s72 = sadd.s32 0, 0
    %p73 = scmp.lt.s32.totalorder %s72, 0
    %s74 = scalar_select %p73, %s72, 0
    %s75 = smul.u32 2, %s74
    %p76 = scmp.eq.s32.totalorder 0, 0
    // Predicated region
    $region10: #{jaccard_loss.1} parent=1 // pred_check
      %p77 = pneg %p76
    $region11: #{jaccard_loss.1} parent=1 // pred_check_branch
      %79 = sbr.rel (%p77) target = $region13
    $region12: #{jaccard_loss.1} parent=1 // pred_region
      %80 = vst [vmem:[#allocation2] sm:$0xff] 0.0
      %81 = vst [vmem:[#allocation2 + $0x8] sm:$0xff] 0.0
      %82 = vst [vmem:[#allocation3] sm:$0xff] 0.0
      %83 = vst [vmem:[#allocation3 + $0x8] sm:$0xff] 0.0
    $region13: #{jaccard_loss.1} parent=1 // pred_fallthru
      _
    %s84 = sadd.s32 0, 0
    %s85 = smul.u32 %s84, 16
    %v86 = vlaneseq
    %v87 = vshrl.u32 %v86, 7
    %v88 = vadd.s32 %v87, 8
    %v89 = vstv %s85
    %v90 = vadd.s32 %v87, %v89
    %v91 = vadd.s32 %v88, %v89
    %vm92 = vcmp.lt.s32.totalorder %v90, 16
    %vm93 = vcmp.lt.s32.totalorder %v91, 16
    %v94 = vld [vmem:[%s59] sm:$0xff]
    %v95 = vld [vmem:[%s59 + $0x8] sm:$0xff]
    %v96 = vld [vmem:[%s71] sm:$0xff]
    %v97 = vld [vmem:[%s71 + $0x8] sm:$0xff]
    %v98 = vsub.f32 %v94, %v96
    %v99 = vsub.f32 %v95, %v97
    %v100 = vld [vmem:[#allocation2] sm:$0xff]
    %v101 = vld [vmem:[#allocation2 + $0x8] sm:$0xff]
    %v102 = vmul.f32 %v94, %v96
    %v103 = vmul.f32 %v95, %v97
    %v104 = vsel %vm92, %v102, 0.0
    %v105 = vsel %vm93, %v103, 0.0
    %v106 = vadd.f32 %v100, %v104
    %v107 = vadd.f32 %v101, %v105
    %108 = vst [vmem:[#allocation2] sm:$0xff] %v106
    %109 = vst [vmem:[#allocation2 + $0x8] sm:$0xff] %v107
    %v110 = vld [vmem:[#allocation3] sm:$0xff]
    %v111 = vld [vmem:[#allocation3 + $0x8] sm:$0xff]
    %v112 = vmul.f32 %v98, %v98
    %v113 = vmul.f32 %v99, %v99
    %v114 = vsel %vm92, %v112, 0.0
    %v115 = vsel %vm93, %v113, 0.0
    %v116 = vadd.f32 %v110, %v114
    %v117 = vadd.f32 %v111, %v115
    %118 = vst [vmem:[#allocation3] sm:$0xff] %v116
    %119 = vst [vmem:[#allocation3 + $0x8] sm:$0xff] %v117
    // Predicated region
    $region14: #{jaccard_loss.1} parent=1 // pred_check
      %p120 = pneg %p76
    $region15: #{jaccard_loss.1} parent=1 // pred_check_branch
      %122 = sbr.rel (%p120) target = $region17
    $region16: #{jaccard_loss.1} parent=1 // pred_region
      %v123 = vld [vmem:[#allocation2] sm:$0xff]
      %v124 = vld [vmem:[#allocation2 + $0x8] sm:$0xff]
      %v125 = vadd.f32 %v123, %v124
      %126 = vadd.xlane.f32.xlu0 %v125
      %v127 = vpop.xlane.xlu0 %126
      %v128 = vrot.slane %v127, 4
      %v129 = vadd.f32 %v127, %v128
      %v130 = vrot.slane %v129, 2
      %v131 = vadd.f32 %v129, %v130
      %v132 = vrot.slane %v131, 1
      %v133 = vadd.f32 %v131, %v132
      %s134 = vtos %v133
      %s135 = scalar_lea.smem [#allocation4], 0
      %136 = sst [smem:[%s135]] %s134
      %v137 = vld [vmem:[#allocation3] sm:$0xff]
      %v138 = vld [vmem:[#allocation3 + $0x8] sm:$0xff]
      %v139 = vadd.f32 %v137, %v138
      %140 = vadd.xlane.f32.xlu0 %v139
      %v141 = vpop.xlane.xlu0 %140
      %v142 = vrot.slane %v141, 4
      %v143 = vadd.f32 %v141, %v142
      %v144 = vrot.slane %v143, 2
      %v145 = vadd.f32 %v143, %v144
      %v146 = vrot.slane %v145, 1
      %v147 = vadd.f32 %v145, %v146
      %s148 = vtos %v147
      %s149 = scalar_lea.smem [#allocation4], 1
      %150 = sst [smem:[%s149]] %s148
    $region17: #{jaccard_loss.1} parent=1 // pred_fallthru
      _
    // Predicated region
    $region18: #{jaccard_loss.1} parent=1 // pred_check
      _
    $region19: #{jaccard_loss.1} parent=1 // pred_check_branch
      %152 = sbr.rel (0) target = $region21
    $region20: #{jaccard_loss.1} parent=1 // pred_region
      %154 = vsyncadd [#allocation5], 0
      %s156 = sshll.u32 %s2, 4
      %s157 = int_to_ptr.vmem [resolvable:$true] %s156
      %159 = dma.smem_to_vmem [#allocation4], 16, %s157, [#allocation5]
    $region21: #{jaccard_loss.1} parent=1 // pred_fallthru
      _
    // Predicated region
    $region22: #{jaccard_loss.1} parent=1 // pred_check
      _
    $region23: #{jaccard_loss.1} parent=1 // pred_check_branch
      %161 = sbr.rel (0) target = $region25
    $region24: #{jaccard_loss.1} parent=1 // pred_region
      %163 = dma.done [#allocation5], 16
    $region25: #{jaccard_loss.1} parent=1 // pred_fallthru
      _
    %164 = sfence
    %165 = vsyncpa [#allocation5], 1

</llo_original>
